<compile_context>
chip_gen: v5e
topology: v5e:2x2
jax: 0.10.0
libtpu: 0.0.40
codegen_flags: <defaults>
</compile_context>

<pallas_src>
import functools

import jax
import jax.numpy as jnp
from jax.experimental import pallas as pl
from jax.experimental.pallas import tpu as pltpu


def _vmem_capacity_bytes():
    """Physical VMEM per TensorCore; conservative fallback if the query fails."""
    try:
        return int(pltpu.get_tpu_info().vmem_capacity_bytes)
    except Exception:
        return 64 << 20  # v7x physical VMEM -- safe lower bound on all generations


# ---------------------------------------------------------------------------
# Fused single-call path (x fits comfortably in VMEM).
# ---------------------------------------------------------------------------
def _fused_kernel(x_ref, y_ref, ls_ref):
    """Stats + normalize on a fully VMEM-resident (N, C, HW) block."""
    x = x_ref[...].astype(jnp.float32)                 # (N, C, HW)
    n_b = x.shape[0]
    m = x.shape[0] * x.shape[2]

    # Per-channel anchor (first element of batch 0) stabilizes the one-pass
    # sum / sum-of-squares variance against catastrophic cancellation.
    anchor = x[0][:, 0:1]                              # (C, 1)
    xs = x - anchor                                    # broadcast over N, HW

    s_n = jnp.sum(xs, axis=2, keepdims=True)           # (N, C, 1) lane reduce
    q_n = jnp.sum(xs * xs, axis=2, keepdims=True)      # (N, C, 1)
    s = s_n[0]
    q = q_n[0]
    for i in range(1, n_b):                            # tiny static unroll over N
        s = s + s_n[i]
        q = q + q_n[i]
    # s, q: (C, 1)

    mean = anchor + s / m
    var = (q - s * s / m) / (m - 1)                    # unbiased (ddof=1)
    std = jnp.sqrt(jnp.maximum(var, 0.0))
    inv = 1.0 / (std + 1e-9)
    scale = inv + 1e-9                                 # == exp(log(inv)) + 1e-9
    shift = -(mean * scale)

    y_ref[...] = (x * scale + shift).astype(y_ref.dtype)
    ls_ref[...] = jnp.log(inv)                         # logscale_tmp == 3 * logscale


def _actnorm_fused(x, vmem_cap):
    n, c, h, w = x.shape
    hw = h * w
    x3 = x.reshape(n, c, hw)                           # free contiguous reshape
    elem_bytes = x.dtype.itemsize
    x_f32_bytes = n * c * hw * 4
    vmem_limit = int(min(vmem_cap * 3 // 4, max(32 << 20, 8 * x_f32_bytes)))

    y3, ls = pl.pallas_call(
        _fused_kernel,
        out_shape=(
            jax.ShapeDtypeStruct((n, c, hw), x.dtype),
            jax.ShapeDtypeStruct((c, 1), jnp.float32),
        ),
        grid_spec=pltpu.PrefetchScalarGridSpec(
            num_scalar_prefetch=0,
            grid=(1,),
            in_specs=[pl.BlockSpec((n, c, hw), lambda i: (0, 0, 0))],
            out_specs=(
                pl.BlockSpec((n, c, hw), lambda i: (0, 0, 0)),
                pl.BlockSpec((c, 1), lambda i: (0, 0)),
            ),
        ),
        compiler_params=pltpu.CompilerParams(
            dimension_semantics=("arbitrary",),
            vmem_limit_bytes=vmem_limit,
        ),
        cost_estimate=pl.CostEstimate(
            flops=int(8 * n * c * hw),
            transcendentals=int(3 * c),
            bytes_accessed=int(2 * n * c * hw * elem_bytes),
        ),
    )(x3)

    dlogdet = jnp.sum(ls) * float(hw)
    return y3.reshape(n, c, h, w), dlogdet


# ---------------------------------------------------------------------------
# Two-pass tiled path (large activations).
# ---------------------------------------------------------------------------
def _stats_kernel(anchor_ref, x_ref, psum_ref, psq_ref, *, hw, needs_mask):
    """Per-row (= per (n, c)) partial sums of (x - anchor) and (x - anchor)^2.

    The HW grid axis (axis 1) is the reduction axis and must stay innermost /
    'arbitrary': psum/psq output blocks are revisited across it (zeroed at
    t == 0, written back when the row block changes).
    """
    t = pl.program_id(1)
    tile_hw = x_ref.shape[1]

    @pl.when(t == 0)
    def _():
        psum_ref[...] = jnp.zeros_like(psum_ref)
        psq_ref[...] = jnp.zeros_like(psq_ref)

    xs = x_ref[...].astype(jnp.float32) - anchor_ref[...]      # (TR, T)
    if needs_mask:
        # hw is not a multiple of the lane tile: zero out padded tail lanes.
        lane = jax.lax.broadcasted_iota(jnp.int32, xs.shape, 1)
        xs = jnp.where(t * tile_hw + lane < hw, xs, 0.0)
    psum_ref[...] += jnp.sum(xs, axis=1, keepdims=True)
    psq_ref[...] += jnp.sum(xs * xs, axis=1, keepdims=True)


def _normalize_kernel(scale_ref, shift_ref, x_ref, y_ref):
    """y = x * scale + shift (per-row FMA; scale/shift broadcast over lanes)."""
    x = x_ref[...].astype(jnp.float32)
    y_ref[...] = (x * scale_ref[...] + shift_ref[...]).astype(y_ref.dtype)


def _choose_tiles(rows, hw, budget_elems):
    """Pick (tile_r, tile_hw, needs_mask) for the row-packed (rows, hw) view.

    Tiles are sized by an element budget (bytes/4); the lane tile prefers a
    multiple-of-128 divisor of hw, else the full row if it fits, else a masked
    pl.cdiv tail.  Out-of-bounds tail *rows* need no masking: per-row stats of
    garbage rows are dropped on the (partially OOB) writeback.
    """
    min_rows = rows if rows < 8 else 8

    lane_budget = max(128, (budget_elems // max(min_rows, 1)) // 128 * 128)
    if hw <= lane_budget:
        tile_hw, needs_mask = hw, False
    else:
        tile_hw, needs_mask = 0, False
        t = lane_budget
        while t >= 128:
            if hw % t == 0:
                tile_hw = t
                break
            t -= 128
        if tile_hw == 0:
            tile_hw, needs_mask = lane_budget, True     # cdiv grid + masked tail

    row_budget = max(min_rows, budget_elems // tile_hw)
    if rows <= row_budget:
        tile_r = rows
    else:
        row_budget = max(8, (row_budget // 8) * 8)
        tile_r = 0
        r = row_budget
        while r >= 8:
            if rows % r == 0:
                tile_r = r
                break
            r -= 8
        if tile_r == 0:
            tile_r = row_budget                         # cdiv grid; OOB rows harmless
    return tile_r, tile_hw, needs_mask


def _actnorm_two_pass(x, vmem_cap, tile_budget_bytes):
    n, c, h, w = x.shape
    hw = h * w
    m = n * hw
    rows = n * c
    elem_bytes = x.dtype.itemsize

    # Row-packed view (free contiguous reshape): full sublane density even for
    # C < 8, H*W lane-dense for DMA and stores.
    x2 = x.reshape(rows, hw)

    if tile_budget_bytes is None:
        # Generation-aware byte cap: ~4 MiB tiles on v7x (64 MiB VMEM),
        # ~8 MiB on v5e/v6e (128 MiB).  No hard lane-count cap.
        tile_budget_bytes = max(1 << 20, vmem_cap // 16)
    budget_elems = max(8 * 128, int(tile_budget_bytes) // 4)

    tile_r, tile_hw, needs_mask = _choose_tiles(rows, hw, budget_elems)
    grid = (pl.cdiv(rows, tile_r), pl.cdiv(hw, tile_hw))

    tile_bytes_f32 = tile_r * tile_hw * 4
    vmem_limit = int(min(vmem_cap * 3 // 4, max(32 << 20, 8 * tile_bytes_f32)))

    # Per-channel anchor x[0, :, 0, 0] for a numerically shifted one-pass
    # variance; tiled to one value per packed (n, c) row.
    anchor_c = x2[:c, 0].astype(jnp.float32)                    # (C,)
    anchor_rows = jnp.tile(anchor_c, n).reshape(rows, 1)        # (rows, 1)

    # ---- Pass 1: per-row partial moments (HBM traffic ~ 1x |x|) ------------
    psum, psq = pl.pallas_call(
        functools.partial(_stats_kernel, hw=hw, needs_mask=needs_mask),
        out_shape=(
            jax.ShapeDtypeStruct((rows, 1), jnp.float32),
            jax.ShapeDtypeStruct((rows, 1), jnp.float32),
        ),
        grid_spec=pltpu.PrefetchScalarGridSpec(
            num_scalar_prefetch=0,
            grid=grid,
            in_specs=[
                pl.BlockSpec((tile_r, 1), lambda r, t: (r, 0)),
                pl.BlockSpec((tile_r, tile_hw), lambda r, t: (r, t)),
            ],
            out_specs=(
                pl.BlockSpec((tile_r, 1), lambda r, t: (r, 0)),
                pl.BlockSpec((tile_r, 1), lambda r, t: (r, 0)),
            ),
        ),
        compiler_params=pltpu.CompilerParams(
            dimension_semantics=("parallel", "arbitrary"),
            vmem_limit_bytes=vmem_limit,
        ),
        cost_estimate=pl.CostEstimate(
            flops=int(4 * rows * hw),
            transcendentals=0,
            bytes_accessed=int(elem_bytes * rows * hw + 12 * rows),
        ),
    )(anchor_rows, x2)

    # ---- O(C) finalize in plain JAX glue ------------------------------------
    s_c = jnp.sum(psum[:, 0].reshape(n, c), axis=0)             # (C,)
    q_c = jnp.sum(psq[:, 0].reshape(n, c), axis=0)              # (C,)
    mean = anchor_c + s_c / m
    var = (q_c - s_c * s_c / m) / (m - 1)                       # unbiased (ddof=1)
    std = jnp.sqrt(jnp.maximum(var, 0.0))
    inv = 1.0 / (std + 1e-9)
    logscale_tmp = jnp.log(inv)                                 # == 3 * logscale
    scale = inv + 1e-9                                          # == exp(logscale_tmp)+1e-9
    shift = -(mean * scale)
    dlogdet = jnp.sum(logscale_tmp) * float(hw)

    scale_rows = jnp.tile(scale, n).reshape(rows, 1).astype(jnp.float32)
    shift_rows = jnp.tile(shift, n).reshape(rows, 1).astype(jnp.float32)

    # ---- Pass 2: streaming FMA normalize (HBM traffic ~ 2x |x|) -------------
    y2 = pl.pallas_call(
        _normalize_kernel,
        out_shape=jax.ShapeDtypeStruct((rows, hw), x.dtype),
        grid_spec=pltpu.PrefetchScalarGridSpec(
            num_scalar_prefetch=0,
            grid=grid,
            in_specs=[
                pl.BlockSpec((tile_r, 1), lambda r, t: (r, 0)),
                pl.BlockSpec((tile_r, 1), lambda r, t: (r, 0)),
                pl.BlockSpec((tile_r, tile_hw), lambda r, t: (r, t)),
            ],
            out_specs=pl.BlockSpec((tile_r, tile_hw), lambda r, t: (r, t)),
        ),
        compiler_params=pltpu.CompilerParams(
            dimension_semantics=("parallel", "parallel"),
            vmem_limit_bytes=vmem_limit,
        ),
        cost_estimate=pl.CostEstimate(
            flops=int(2 * rows * hw),
            transcendentals=0,
            bytes_accessed=int(2 * elem_bytes * rows * hw + 8 * rows),
        ),
    )(scale_rows, shift_rows, x2)

    return y2.reshape(n, c, h, w), dlogdet


# ---------------------------------------------------------------------------
# Public entry point.
# ---------------------------------------------------------------------------
def actnorm_forward(x, logdet=None, *, force_two_pass=False, tile_budget_bytes=None):
    """ActNorm.forward (data-dependent init on first call) for NCHW input.

    Returns (y, logdet).  `force_two_pass` / `tile_budget_bytes` exist only to
    exercise the tiled code paths at small shapes in the self-test.
    """
    n, c, h, w = x.shape
    hw = h * w
    vmem_cap = _vmem_capacity_bytes()

    x_f32_bytes = n * c * hw * 4
    use_fused = (not force_two_pass
                 and x_f32_bytes <= vmem_cap // 12
                 and n <= 256)

    if use_fused:
        y, dlogdet = _actnorm_fused(x, vmem_cap)
    else:
        y, dlogdet = _actnorm_two_pass(x, vmem_cap, tile_budget_bytes)

    if logdet is not None:
        logdet = logdet + dlogdet
    return y, logdet


def _actnorm_reference(x, logdet=None):
    """Pure-JAX reference mirroring the PyTorch module exactly."""
    n, c, h, w = x.shape
    mean = jnp.mean(x, axis=(0, 2, 3), keepdims=True)
    std = jnp.std(x, axis=(0, 2, 3), keepdims=True, ddof=1)
    logscale_tmp = jnp.log(1.0 / (std + 1e-9))         # == 3 * logscale
    y = (x - mean) * (jnp.exp(logscale_tmp) + 1e-9)
    dlogdet = jnp.sum(logscale_tmp) * (h * w)
    if logdet is not None:
        logdet = logdet + dlogdet
    return y, logdet


def _check(x, **kwargs):
    n, c, h, w = x.shape
    logdet_in = jnp.float32(0.0)
    y, logdet = actnorm_forward(x, logdet_in, **kwargs)
    y = jax.block_until_ready(y)
    logdet = jax.block_until_ready(logdet)
    y_ref, logdet_ref = _actnorm_reference(x, logdet_in)
    assert jnp.allclose(y, y_ref, atol=1e-4, rtol=1e-5), "output mismatch"
    # dlogdet amplifies per-channel log-std rounding by H*W; scale the absolute
    # tolerance accordingly (one-pass vs. centered two-pass f32 summation).
    atol_ld = max(5e-4, 2e-6 * c * h * w)
    assert jnp.allclose(logdet, logdet_ref, atol=atol_ld, rtol=1e-5), "logdet mismatch"


if __name__ == "__main__":
    key = jax.random.PRNGKey(0)
    k0, k1, k2 = jax.random.split(key, 3)

    # Primary check: module-consistent small shape -> fused single-kernel path.
    x = jax.random.normal(k0, (2, 4, 16, 16), dtype=jnp.float32)
    _check(x)

    # Secondary checks: force the two-pass tiled path with a small byte budget
    # so the row/HW tiling and the accumulation across the HW grid axis run.
    x_big = jax.random.normal(k1, (2, 8, 64, 64), dtype=jnp.float32)
    _check(x_big, force_two_pass=True, tile_budget_bytes=64 << 10)

    # Irregular H*W (600 lanes, not a multiple of 128) -> lane-masked tail tiles.
    x_irr = jax.random.normal(k2, (2, 8, 24, 25), dtype=jnp.float32)
    _check(x_irr, force_two_pass=True, tile_budget_bytes=4 << 10)

    print("KERNEL_OK")
</pallas_src>

<mosaic_0001>
module attributes {stable_mosaic.version = 11 : i64} {
  func.func @_fused_kernel(%arg0: i32, %arg1: memref<2x4x256xf32, #tpu.memory_space<vmem>>, %arg2: memref<2x4x256xf32, #tpu.memory_space<vmem>>, %arg3: memref<4x1xf32, #tpu.memory_space<vmem>>) attributes {dimension_semantics = [#tpu.dimension_semantics<arbitrary>], iteration_bounds = array<i64: 1>, scalar_prefetch = 0 : i64, scratch_operands = 0 : i64, tpu.core_type = #tpu.core_type<tc>, window_params = [{pipeline_mode = #tpu.pipeline_mode<synchronous>, transform_indices = @transform_0, window_bounds = array<i64: 2, 4, 256>}, {pipeline_mode = #tpu.pipeline_mode<synchronous>, transform_indices = @transform_1, window_bounds = array<i64: 2, 4, 256>}, {pipeline_mode = #tpu.pipeline_mode<synchronous>, transform_indices = @transform_2, window_bounds = array<i64: 4, 1>}]} {
    %c0 = arith.constant 0 : index
    %c0_0 = arith.constant 0 : index
    %c0_1 = arith.constant 0 : index
    %0 = vector.load %arg1[%c0, %c0_0, %c0_1] : memref<2x4x256xf32, #tpu.memory_space<vmem>>, vector<2x4x256xf32>
    %1 = vector.extract_strided_slice %0 {offsets = [0, 0, 0], sizes = [1, 4, 256], strides = [1, 1, 1]} : vector<2x4x256xf32> to vector<1x4x256xf32>
    %2 = vector.shape_cast %1 : vector<1x4x256xf32> to vector<4x256xf32>
    %3 = vector.extract_strided_slice %2 {offsets = [0, 0], sizes = [4, 1], strides = [1, 1]} : vector<4x256xf32> to vector<4x1xf32>
    %4 = vector.shape_cast %3 : vector<4x1xf32> to vector<1x4x1xf32>
    %5 = vector.broadcast %4 : vector<1x4x1xf32> to vector<2x4x256xf32>
    %6 = arith.subf %0, %5 : vector<2x4x256xf32>
    %cst = arith.constant dense<0.000000e+00> : vector<2x4xf32>
    %7 = vector.multi_reduction <add>, %6, %cst [2] : vector<2x4x256xf32> to vector<2x4xf32>
    %8 = vector.shape_cast %7 : vector<2x4xf32> to vector<2x4x1xf32>
    %9 = arith.mulf %6, %6 : vector<2x4x256xf32>
    %cst_2 = arith.constant dense<0.000000e+00> : vector<2x4xf32>
    %10 = vector.multi_reduction <add>, %9, %cst_2 [2] : vector<2x4x256xf32> to vector<2x4xf32>
    %11 = vector.shape_cast %10 : vector<2x4xf32> to vector<2x4x1xf32>
    %12 = vector.extract_strided_slice %8 {offsets = [0, 0, 0], sizes = [1, 4, 1], strides = [1, 1, 1]} : vector<2x4x1xf32> to vector<1x4x1xf32>
    %13 = vector.shape_cast %12 : vector<1x4x1xf32> to vector<4x1xf32>
    %14 = vector.extract_strided_slice %11 {offsets = [0, 0, 0], sizes = [1, 4, 1], strides = [1, 1, 1]} : vector<2x4x1xf32> to vector<1x4x1xf32>
    %15 = vector.shape_cast %14 : vector<1x4x1xf32> to vector<4x1xf32>
    %16 = vector.extract_strided_slice %8 {offsets = [1, 0, 0], sizes = [1, 4, 1], strides = [1, 1, 1]} : vector<2x4x1xf32> to vector<1x4x1xf32>
    %17 = vector.shape_cast %16 : vector<1x4x1xf32> to vector<4x1xf32>
    %18 = arith.addf %13, %17 : vector<4x1xf32>
    %19 = vector.extract_strided_slice %11 {offsets = [1, 0, 0], sizes = [1, 4, 1], strides = [1, 1, 1]} : vector<2x4x1xf32> to vector<1x4x1xf32>
    %20 = vector.shape_cast %19 : vector<1x4x1xf32> to vector<4x1xf32>
    %21 = arith.addf %15, %20 : vector<4x1xf32>
    %cst_3 = arith.constant 5.120000e+02 : f32
    %22 = vector.broadcast %cst_3 : f32 to vector<4x1xf32>
    %23 = arith.divf %18, %22 : vector<4x1xf32>
    %24 = arith.addf %3, %23 : vector<4x1xf32>
    %25 = arith.mulf %18, %18 : vector<4x1xf32>
    %cst_4 = arith.constant 5.120000e+02 : f32
    %26 = vector.broadcast %cst_4 : f32 to vector<4x1xf32>
    %27 = arith.divf %25, %26 : vector<4x1xf32>
    %28 = arith.subf %21, %27 : vector<4x1xf32>
    %cst_5 = arith.constant 5.110000e+02 : f32
    %29 = vector.broadcast %cst_5 : f32 to vector<4x1xf32>
    %30 = arith.divf %28, %29 : vector<4x1xf32>
    %cst_6 = arith.constant 0.000000e+00 : f32
    %31 = vector.broadcast %cst_6 : f32 to vector<4x1xf32>
    %32 = arith.maximumf %30, %31 : vector<4x1xf32>
    %33 = math.sqrt %32 : vector<4x1xf32>
    %cst_7 = arith.constant 9.99999971E-10 : f32
    %34 = vector.broadcast %cst_7 : f32 to vector<4x1xf32>
    %35 = arith.addf %33, %34 : vector<4x1xf32>
    %cst_8 = arith.constant 1.000000e+00 : f32
    %36 = vector.broadcast %cst_8 : f32 to vector<4x1xf32>
    %37 = arith.divf %36, %35 : vector<4x1xf32>
    %cst_9 = arith.constant 9.99999971E-10 : f32
    %38 = vector.broadcast %cst_9 : f32 to vector<4x1xf32>
    %39 = arith.addf %37, %38 : vector<4x1xf32>
    %40 = arith.mulf %24, %39 : vector<4x1xf32>
    %cst_10 = arith.constant 0.000000e+00 : f32
    %41 = vector.broadcast %cst_10 : f32 to vector<4x1xf32>
    %42 = arith.subf %41, %40 : vector<4x1xf32>
    %43 = vector.shape_cast %39 : vector<4x1xf32> to vector<1x4x1xf32>
    %44 = vector.broadcast %43 : vector<1x4x1xf32> to vector<2x4x256xf32>
    %45 = arith.mulf %0, %44 : vector<2x4x256xf32>
    %46 = vector.shape_cast %42 : vector<4x1xf32> to vector<1x4x1xf32>
    %47 = vector.broadcast %46 : vector<1x4x1xf32> to vector<2x4x256xf32>
    %48 = arith.addf %45, %47 : vector<2x4x256xf32>
    %c0_11 = arith.constant 0 : index
    %c0_12 = arith.constant 0 : index
    %c0_13 = arith.constant 0 : index
    %49 = vector.load %arg2[%c0_11, %c0_12, %c0_13] : memref<2x4x256xf32, #tpu.memory_space<vmem>>, vector<2x4x256xf32>
    tpu.vector_store %arg2[%c0_11, %c0_12, %c0_13], %48 {strides = array<i32>} : memref<2x4x256xf32, #tpu.memory_space<vmem>>, vector<2x4x256xf32>,
    %50 = math.log %37 : vector<4x1xf32>
    %c0_14 = arith.constant 0 : index
    %c0_15 = arith.constant 0 : index
    %51 = vector.load %arg3[%c0_14, %c0_15] : memref<4x1xf32, #tpu.memory_space<vmem>>, vector<4x1xf32>
    tpu.vector_store %arg3[%c0_14, %c0_15], %50 {strides = array<i32>} : memref<4x1xf32, #tpu.memory_space<vmem>>, vector<4x1xf32>,
    return
  }
  func.func @transform_0(%arg0: i32) -> (i32, i32, i32) {
    %c0_i32 = arith.constant 0 : i32
    %c0_i32_0 = arith.constant 0 : i32
    %c0_i32_1 = arith.constant 0 : i32
    %c0_i32_2 = arith.constant 0 : i32
    return %c0_i32, %c0_i32_0, %c0_i32_1 : i32, i32, i32
  }
  func.func @transform_1(%arg0: i32) -> (i32, i32, i32) {
    %c0_i32 = arith.constant 0 : i32
    %c0_i32_0 = arith.constant 0 : i32
    %c0_i32_1 = arith.constant 0 : i32
    %c0_i32_2 = arith.constant 0 : i32
    return %c0_i32, %c0_i32_0, %c0_i32_1 : i32, i32, i32
  }
  func.func @transform_2(%arg0: i32) -> (i32, i32) {
    %c0_i32 = arith.constant 0 : i32
    %c0_i32_0 = arith.constant 0 : i32
    %c0_i32_1 = arith.constant 0 : i32
    return %c0_i32, %c0_i32_0 : i32, i32
  }
}

</mosaic_0001>

<llo_original>
// kernel: tpu_custom_call.1
$region0: #{tpu_custom_call.1}
  #allocation0 [shape = 'u32[]', space=smem, size = 0x4, offset = 0x4, fixed_abs, tag = 'smem constant byte address 0x4 - core index']
  #allocation1 [shape = 'u32[72,128]{1,0:T(1,128)}', space=vmem, size = 0x9000, scoped, tag = 'internal scratch']
  %s0 = inlined_call_operand.hbm [shape: f32[2,4,256], index: 0, kind: input, shape index: {}]
  %s1 = inlined_call_operand.hbm [shape: f32[2,4,256], index: 1, kind: output, shape index: {0}]
  %s2 = inlined_call_operand.vmem [shape: f32[4,1], index: 2, kind: output, shape index: {1}]
  %3 = xla_tuple %s1, %s2
  %s4 = sld [smem:[#allocation0]]
  $region26: #{tpu_custom_call.1} parent=0
    _
  %s6 = ssub.s32 1, %s4
  %s7 = scalar_select 0, %s6, %s4
  $region1: #{tpu_custom_call.1} parent=0
    #allocation2 [shape = 'u8[8192]{0}', space=vmem, size = 0x2000, scoped, tag = 'input window, operand 0, single buffered']
    #allocation3 [shape = 's32[1]{0}', space=sflag, size = 0x4, scoped, tag = 'scoped memory for tpu_custom_call.1']
    #allocation4 [shape = 's32[1]{0}', space=sflag, size = 0x4, scoped, tag = 'scoped memory for tpu_custom_call.1']
    #allocation5 [shape = 'u8[8192]{0}', space=vmem, size = 0x2000, scoped, tag = 'output window, operand 0, single buffered']
    %8 = vsyncpa [#allocation3], 0
    %9 = vsyncpa [#allocation4], 0
    // Predicated region
    $region2: #{tpu_custom_call.1} parent=1 // pred_check
      _
    $region3: #{tpu_custom_call.1} parent=1 // pred_check_branch
      %11 = sbr.rel (0) target = $region5
    $region4: #{tpu_custom_call.1} parent=1 // pred_region
      %13 = vsyncadd [#allocation3], 0
      %s14 = sshll.u32 %s0, 4
      %s15 = int_to_ptr.hbm [resolvable:$true] %s14
      %s16 = sshll.u32 [#allocation2], 4
      %s17 = int_to_ptr.vmem [resolvable:$true] %s16
      %22 = dma.hbm_to_vmem [thread:$0]  %s15, 256, %s17, [#allocation3], 128, 128, 8
    $region5: #{tpu_custom_call.1} parent=1 // pred_fallthru
      _
    // Predicated region
    $region6: #{tpu_custom_call.1} parent=1 // pred_check
      _
    $region7: #{tpu_custom_call.1} parent=1 // pred_check_branch
      %24 = sbr.rel (0) target = $region9
    $region8: #{tpu_custom_call.1} parent=1 // pred_region
      %26 = dma.done [#allocation3], 256
    $region9: #{tpu_custom_call.1} parent=1 // pred_fallthru
      _
    %v27 = vld [vmem:[#allocation2] sm:$0xff]
    %v28 = vld [vmem:[#allocation2 + $0x8] sm:$0xff]
    %30 = vset.pattern.permute.xlu0 0
    %31 = vperm.xlu0 %30, %v27
    %v32 = vpop.permute.xlu0 %31
    %v35 = vunpack.c.l.s4 839922192
    %v36 = vunpack.c.0.s8 %v35
    %v37 = vperm.slane %v32, %v36
    %v38 = vsub.f32 %v27, %v37
    %v39 = vsub.f32 %v28, %v37
    %42 = vst [vmem:[#allocation1] ss:$2 sm:$0xff] %v38
    %v43 = vld.sshfl [vmem:[#allocation1] sm:$0xff pattern:$0x75316420]
    %v44 = vld.sshfl [vmem:[#allocation1 + $0x8] sm:$0xff pattern:$0x75316420]
    %s45 = scalar_lea.vmem [#allocation1], 16
    %46 = vst [vmem:[%s45] ss:$2 sm:$0xff] %v39
    %v47 = vld.sshfl [vmem:[#allocation1 + $0x10] sm:$0xff pattern:$0x75316420]
    %v48 = vld.sshfl [vmem:[#allocation1 + $0x18] sm:$0xff pattern:$0x75316420]
    %vm53 = vcmask 1043456
    %v54 = vsel %vm53, %v43, 0.0
    %v55 = vsel %vm53, %v44, 0.0
    %v56 = vadd.f32 %v54, %v55
    %57 = vadd.xlane.f32.xlu0 %v56
    %v58 = vpop.xlane.xlu0 %57
    %v59 = vsel %vm53, %v47, 0.0
    %v60 = vsel %vm53, %v48, 0.0
    %v61 = vadd.f32 %v59, %v60
    %62 = vadd.xlane.f32.xlu0 %v61
    %v63 = vpop.xlane.xlu0 %62
    %v64 = vmul.f32 %v38, %v38
    %v65 = vmul.f32 %v39, %v39
    %68 = vst [vmem:[#allocation1] ss:$2 sm:$0xff] %v64
    %v69 = vld.sshfl [vmem:[#allocation1] sm:$0xff pattern:$0x75316420]
    %v70 = vld.sshfl [vmem:[#allocation1 + $0x8] sm:$0xff pattern:$0x75316420]
    %s71 = scalar_lea.vmem [#allocation1], 16
    %72 = vst [vmem:[%s71] ss:$2 sm:$0xff] %v65
    %v73 = vld.sshfl [vmem:[#allocation1 + $0x10] sm:$0xff pattern:$0x75316420]
    %v74 = vld.sshfl [vmem:[#allocation1 + $0x18] sm:$0xff pattern:$0x75316420]
    %v79 = vsel %vm53, %v69, 0.0
    %v80 = vsel %vm53, %v70, 0.0
    %v81 = vadd.f32 %v79, %v80
    %82 = vadd.xlane.f32.xlu0 %v81
    %v83 = vpop.xlane.xlu0 %82
    %v84 = vsel %vm53, %v73, 0.0
    %v85 = vsel %vm53, %v74, 0.0
    %v86 = vadd.f32 %v84, %v85
    %87 = vadd.xlane.f32.xlu0 %v86
    %v88 = vpop.xlane.xlu0 %87
    %v89 = vadd.f32 %v58, %v63
    %v90 = vadd.f32 %v83, %v88
    %v91 = vrcp.pop 512.0
    %v92 = vmul.f32 512.0, %v91
    %v93 = vsub.f32 1.0, %v92
    %v94 = vmul.f32 %v91, %v93
    %v95 = vadd.f32 %v91, %v94
    %vm96 = vweird.f32 %v91
    %v97 = vsel %vm96, %v91, %v95
    %v98 = vmul.f32 %v89, %v97
    %v99 = vadd.f32 %v27, %v98
    %v100 = vmul.f32 %v89, %v89
    %v101 = vmul.f32 %v100, %v97
    %v102 = vsub.f32 %v90, %v101
    %v103 = vrcp.pop 511.0
    %v104 = vmul.f32 511.0, %v103
    %v105 = vsub.f32 1.0, %v104
    %v106 = vmul.f32 %v103, %v105
    %v107 = vadd.f32 %v103, %v106
    %vm108 = vweird.f32 %v103
    %v109 = vsel %vm108, %v103, %v107
    %v110 = vmul.f32 %v102, %v109
    %v111 = vmax.f32 %v110, 0.0
    %v112 = vrsqrt.pop %v111
    %v113 = vmul.f32 %v112, %v111
    %v114 = vmul.f32 %v113, %v112
    %v115 = vmul.f32 0.5, %v114
    %v116 = vsub.f32 1.5, %v115
    %v117 = vmul.f32 %v112, %v116
    %v118 = vmul.f32 %v111, %v117
    %vm119 = vcmp.eq.f32.partialorder %v111, inf
    %v120 = vsel %vm119, %v111, %v118
    %vm121 = vcmp.eq.f32.partialorder %v111, 0.0
    %v122 = vand.u32 %v111, 2147483648
    %v123 = vsel %vm121, %v122, %v120
    %v124 = vadd.f32 %v123, 1e-09
    %v125 = vrcp.pop %v124
    %v126 = vmul.f32 %v124, %v125
    %v127 = vsub.f32 1.0, %v126
    %v128 = vmul.f32 %v125, %v127
    %v129 = vadd.f32 %v125, %v128
    %vm130 = vweird.f32 %v124
    %vm131 = vweird.f32 %v125
    %vm132 = vmor %vm130, %vm131
    %v133 = vsel %vm132, %v125, %v129
    %v134 = vand.u32 2147483647, %v124
    %vm135 = vcmp.eq.f32.partialorder %v134, 8.507059e+37
    %v136 = vand.u32 %v124, 2147483648
    %v137 = vor.u32 1.1754944e-38, %v136
    %v138 = vsel %vm135, %v137, %v133
    %v139 = vmul.f32 1.0, %v138
    %v140 = vadd.f32 %v139, 1e-09
    %v141 = vmul.f32 %v99, %v140
    %v142 = vsub.f32 0.0, %v141
    %v145 = vunpack.c.l.s4 839922192
    %v146 = vunpack.c.0.s8 %v145
    %v147 = vperm.slane %v140, %v146
    %v149 = vmul.f32 %v27, %v147
    %v150 = vmul.f32 %v28, %v147
    %152 = vset.pattern.permute.xlu0 0
    %153 = vperm.xlu0 %152, %v142
    %v154 = vpop.permute.xlu0 %153
    %v157 = vunpack.c.l.s4 839922192
    %v158 = vunpack.c.0.s8 %v157
    %v159 = vperm.slane %v154, %v158
    %v160 = vadd.f32 %v149, %v159
    %v161 = vadd.f32 %v150, %v159
    %162 = vst [vmem:[#allocation5] sm:$0xff] %v160
    %163 = vst [vmem:[#allocation5 + $0x8] sm:$0xff] %v161
    %v164 = vlog2.pop %v139
    %v165 = vmul.f32 %v164, 0.6931472
    %vm166 = vcmask 3072
    %167 = vst.msk [vmem:[%s2] sm:$0xf] %vm166, %v165
    // Predicated region
    $region10: #{tpu_custom_call.1} parent=1 // pred_check
      _
    $region11: #{tpu_custom_call.1} parent=1 // pred_check_branch
      %169 = sbr.rel (0) target = $region13
    $region12: #{tpu_custom_call.1} parent=1 // pred_region
      %171 = vsyncadd [#allocation4], 0
      %s172 = sshll.u32 [#allocation5], 4
      %s173 = int_to_ptr.vmem [resolvable:$true] %s172
      %s174 = sshll.u32 %s1, 4
      %s175 = int_to_ptr.hbm [resolvable:$true] %s174
      %180 = dma.vmem_to_hbm [thread:$0]  %s173, 256, %s175, [#allocation4], 128, 128, 8
    $region13: #{tpu_custom_call.1} parent=1 // pred_fallthru
      _
    // Predicated region
    $region14: #{tpu_custom_call.1} parent=1 // pred_check
      _
    $region15: #{tpu_custom_call.1} parent=1 // pred_check_branch
      %182 = sbr.rel (0) target = $region17
    $region16: #{tpu_custom_call.1} parent=1 // pred_region
      _
    $region17: #{tpu_custom_call.1} parent=1 // pred_fallthru
      _
    // Predicated region
    $region18: #{tpu_custom_call.1} parent=1 // pred_check
      _
    $region19: #{tpu_custom_call.1} parent=1 // pred_check_branch
      %184 = sbr.rel (0) target = $region21
    $region20: #{tpu_custom_call.1} parent=1 // pred_region
      %186 = dma.done [#allocation4], 256
    $region21: #{tpu_custom_call.1} parent=1 // pred_fallthru
      _
    // Predicated region
    $region22: #{tpu_custom_call.1} parent=1 // pred_check
      _
    $region23: #{tpu_custom_call.1} parent=1 // pred_check_branch
      %188 = sbr.rel (0) target = $region25
    $region24: #{tpu_custom_call.1} parent=1 // pred_region
      _
    $region25: #{tpu_custom_call.1} parent=1 // pred_fallthru
      _
    %189 = vsyncpa [#allocation3], 1
    %190 = vsyncpa [#allocation4], 1

</llo_original>
